<compile_context>
chip_gen: v6e
topology: v6e:2x2x1
jax: 0.10.0
libtpu: 0.0.40
codegen_flags: <defaults>
</compile_context>

<pallas_src>
import jax
import jax.numpy as jnp
from jax.experimental import pallas as pl
from jax.experimental.pallas import tpu as pltpu


def _encoder_kernel(x_ref, w1_ref, b1_ref, w2_ref, b2_ref, out_ref):
    # x_ref  : (tm_f, d_in_k)   folded row tile of the input
    # w1_ref : (d_in_k, h_k)    fc1 weight, (in, out) layout (block-diag folded)
    # b1_ref : (1, h_k)
    # w2_ref : (h_k, d_out_k)   fc2 weight, (in, out) layout (block-diag folded)
    # b2_ref : (1, d_out_k)     d_out_k is a multiple of 128 -> lane-dense store
    # out_ref: (tm_f, d_out_k)
    x = x_ref[...]
    h = jnp.dot(x, w1_ref[...], preferred_element_type=jnp.float32)
    h = jnp.maximum(h + b1_ref[...], 0.0)                       # bias + ReLU (VPU)
    y = jnp.dot(h.astype(w2_ref.dtype), w2_ref[...],
                preferred_element_type=jnp.float32)
    out_ref[...] = (y + b2_ref[...]).astype(out_ref.dtype)


def encoder_forward(x, w1, b1, w2, b2, *, row_tile=1024, out_dtype=None):
    """Fused MLP forward.  x: (B, d_in); weights in PyTorch (out, in) layout."""
    assert x.ndim == 2
    B, d_in = x.shape
    h_dim, d_in_w = w1.shape
    d_out, h_dim_w = w2.shape
    assert d_in == d_in_w and h_dim == h_dim_w
    assert b1.shape == (h_dim,) and b2.shape == (d_out,)

    out_dtype = jnp.dtype(out_dtype) if out_dtype is not None else jnp.dtype(x.dtype)
    if B == 0:
        return jnp.zeros((0, d_out), dtype=out_dtype)

    # ---------- one-time wrapper-side layout work (cheap XLA glue) ----------
    # (1) Pre-transpose tiny weights to (in, out) so the MXU gets them straight.
    w1t = w1.T                                   # (d_in,  h_dim)
    w2t = w2.T                                   # (h_dim, d_out)

    # (2) Lane-dense output: fold `fold` consecutive batch rows per output row.
    fold = 128 // d_out if (d_out < 128 and 128 % d_out == 0) else 1
    if fold > 1:
        w1k = jnp.kron(jnp.eye(fold, dtype=w1t.dtype), w1t)   # block-diagonal
        w2k = jnp.kron(jnp.eye(fold, dtype=w2t.dtype), w2t)
        b1k = jnp.tile(b1, fold)
        b2k = jnp.tile(b2, fold)
    else:
        w1k, w2k, b1k, b2k = w1t, w2t, b1, b2
    d_in_k, h_k, d_out_k = d_in * fold, h_dim * fold, d_out * fold

    # (3) Row tile: dtype-aware sublane multiple, divisible by the fold factor,
    #     big by default but capped so the parallel axis keeps >=2 steps.
    sub = max(8, 32 // jnp.dtype(x.dtype).itemsize) * fold
    b_sub = pl.cdiv(B, sub) * sub
    if b_sub <= 2 * sub:
        tm = b_sub                                # tiny batch: single tile
    else:
        tm = min(row_tile, pl.cdiv(pl.cdiv(b_sub, 2), sub) * sub)
    tm = max(tm, sub)
    b_pad = pl.cdiv(B, tm) * tm
    grid = (b_pad // tm,)
    tm_f, b_f = tm // fold, b_pad // fold

    # (4) Pad batch and fold rows together (contiguous reshape, zero cost).
    x_p = x if b_pad == B else jnp.pad(x, ((0, b_pad - B), (0, 0)))
    x_p = x_p.reshape(b_f, d_in_k)
    b1_2d = b1k.reshape(1, h_k)
    b2_2d = b2k.reshape(1, d_out_k)

    # (5) VMEM limit from actual block footprints (+ headroom), capped well
    #     below v7x's 64 MiB per-core VMEM.
    lane = 128
    in_bytes = tm_f * max(d_in_k, lane) * jnp.dtype(x.dtype).itemsize
    out_bytes = tm_f * max(d_out_k, lane) * out_dtype.itemsize
    scratch = 2 * tm_f * max(max(h_k, d_out_k), lane) * 4       # f32 intermediates
    vmem_limit = int(min(32 << 20,
                         max(8 << 20,
                             4 * (in_bytes + out_bytes) + scratch + (2 << 20))))

    out = pl.pallas_call(
        _encoder_kernel,
        out_shape=jax.ShapeDtypeStruct((b_f, d_out_k), out_dtype),
        grid_spec=pltpu.PrefetchScalarGridSpec(
            num_scalar_prefetch=0,
            grid=grid,
            in_specs=[
                pl.BlockSpec((tm_f, d_in_k), lambda i: (i, 0)),    # x row tile
                pl.BlockSpec((d_in_k, h_k), lambda i: (0, 0)),     # W1 (resident)
                pl.BlockSpec((1, h_k), lambda i: (0, 0)),          # b1 (resident)
                pl.BlockSpec((h_k, d_out_k), lambda i: (0, 0)),    # W2 (resident)
                pl.BlockSpec((1, d_out_k), lambda i: (0, 0)),      # b2 (resident)
            ],
            out_specs=pl.BlockSpec((tm_f, d_out_k), lambda i: (i, 0)),
        ),
        compiler_params=pltpu.CompilerParams(
            dimension_semantics=("parallel",),
            vmem_limit_bytes=vmem_limit,
        ),
    )(x_p, w1k, b1_2d, w2k, b2_2d)

    out = out.reshape(b_pad, d_out)               # un-fold (contiguous reshape)
    return out[:B] if b_pad != B else out


def _encoder_ref(x, w1, b1, w2, b2):
    """Pure-JAX reference mirroring the PyTorch module exactly."""
    h = jnp.maximum(x @ w1.T + b1, 0.0)
    return h @ w2.T + b2


if __name__ == "__main__":
    key = jax.random.PRNGKey(0)
    kx, kw1, kb1, kw2, kb2 = jax.random.split(key, 5)

    batch, d_in, hidden, d_out = 8, 2, 32, 64
    x = jax.random.normal(kx, (batch, d_in), dtype=jnp.float32)
    # PyTorch nn.Linear layout: weight (out_features, in_features), bias (out_features,)
    w1 = jax.random.normal(kw1, (hidden, d_in), dtype=jnp.float32) * 0.5
    b1 = jax.random.normal(kb1, (hidden,), dtype=jnp.float32) * 0.1
    w2 = jax.random.normal(kw2, (d_out, hidden), dtype=jnp.float32) * 0.2
    b2 = jax.random.normal(kb2, (d_out,), dtype=jnp.float32) * 0.1

    out = jax.block_until_ready(encoder_forward(x, w1, b1, w2, b2))
    ref = jax.block_until_ready(_encoder_ref(x, w1, b1, w2, b2))

    assert out.shape == (batch, d_out), out.shape
    assert jnp.allclose(out, ref, rtol=1e-5, atol=1e-5), (
        float(jnp.max(jnp.abs(out - ref))),
    )
    print("KERNEL_OK")
</pallas_src>

<mosaic_0001>
module attributes {stable_mosaic.version = 11 : i64} {
  func.func @_encoder_kernel(%arg0: i32, %arg1: memref<8x4xf32, #tpu.memory_space<vmem>>, %arg2: memref<4x64xf32, #tpu.memory_space<vmem>>, %arg3: memref<1x64xf32, #tpu.memory_space<vmem>>, %arg4: memref<64x128xf32, #tpu.memory_space<vmem>>, %arg5: memref<1x128xf32, #tpu.memory_space<vmem>>, %arg6: memref<8x128xf32, #tpu.memory_space<vmem>>) attributes {dimension_semantics = [#tpu.dimension_semantics<parallel>], iteration_bounds = array<i64: 1>, scalar_prefetch = 0 : i64, scratch_operands = 0 : i64, tpu.core_type = #tpu.core_type<tc>, window_params = [{transform_indices = @transform_0, window_bounds = array<i64: 8, 4>}, {pipeline_mode = #tpu.pipeline_mode<synchronous>, transform_indices = @transform_1, window_bounds = array<i64: 4, 64>}, {pipeline_mode = #tpu.pipeline_mode<synchronous>, transform_indices = @transform_2, window_bounds = array<i64: 1, 64>}, {pipeline_mode = #tpu.pipeline_mode<synchronous>, transform_indices = @transform_3, window_bounds = array<i64: 64, 128>}, {pipeline_mode = #tpu.pipeline_mode<synchronous>, transform_indices = @transform_4, window_bounds = array<i64: 1, 128>}, {transform_indices = @transform_5, window_bounds = array<i64: 8, 128>}]} {
    %c0 = arith.constant 0 : index
    %c0_0 = arith.constant 0 : index
    %0 = vector.load %arg1[%c0, %c0_0] : memref<8x4xf32, #tpu.memory_space<vmem>>, vector<8x4xf32>
    %c0_1 = arith.constant 0 : index
    %c0_2 = arith.constant 0 : index
    %1 = vector.load %arg2[%c0_1, %c0_2] : memref<4x64xf32, #tpu.memory_space<vmem>>, vector<4x64xf32>
    %cst = arith.constant dense<0.000000e+00> : vector<8x64xf32>
    %2 = tpu.matmul %0, %1, %cst {dimension_numbers = #tpu.dot_dimension_numbers<[1], [0], [0], [1], [0, 0, 1, 1], [], []>} : vector<8x4xf32>, vector<4x64xf32>, vector<8x64xf32> -> vector<8x64xf32>
    %c0_3 = arith.constant 0 : index
    %c0_4 = arith.constant 0 : index
    %3 = vector.load %arg3[%c0_3, %c0_4] : memref<1x64xf32, #tpu.memory_space<vmem>>, vector<1x64xf32>
    %4 = vector.broadcast %3 : vector<1x64xf32> to vector<8x64xf32>
    %5 = arith.addf %2, %4 : vector<8x64xf32>
    %cst_5 = arith.constant 0.000000e+00 : f32
    %6 = vector.broadcast %cst_5 : f32 to vector<8x64xf32>
    %7 = arith.maximumf %5, %6 : vector<8x64xf32>
    %c0_6 = arith.constant 0 : index
    %c0_7 = arith.constant 0 : index
    %8 = vector.load %arg4[%c0_6, %c0_7] : memref<64x128xf32, #tpu.memory_space<vmem>>, vector<64x128xf32>
    %cst_8 = arith.constant dense<0.000000e+00> : vector<8x128xf32>
    %9 = tpu.matmul %7, %8, %cst_8 {dimension_numbers = #tpu.dot_dimension_numbers<[1], [0], [0], [1], [0, 0, 1, 1], [], []>} : vector<8x64xf32>, vector<64x128xf32>, vector<8x128xf32> -> vector<8x128xf32>
    %c0_9 = arith.constant 0 : index
    %c0_10 = arith.constant 0 : index
    %10 = vector.load %arg5[%c0_9, %c0_10] : memref<1x128xf32, #tpu.memory_space<vmem>>, vector<1x128xf32>
    %11 = vector.broadcast %10 : vector<1x128xf32> to vector<8x128xf32>
    %12 = arith.addf %9, %11 : vector<8x128xf32>
    %c0_11 = arith.constant 0 : index
    %c0_12 = arith.constant 0 : index
    %13 = vector.load %arg6[%c0_11, %c0_12] : memref<8x128xf32, #tpu.memory_space<vmem>>, vector<8x128xf32>
    tpu.vector_store %arg6[%c0_11, %c0_12], %12 {strides = array<i32>} : memref<8x128xf32, #tpu.memory_space<vmem>>, vector<8x128xf32>,
    return
  }
  func.func @transform_0(%arg0: i32) -> (i32, i32) {
    %c0_i32 = arith.constant 0 : i32
    %c0_i32_0 = arith.constant 0 : i32
    return %arg0, %c0_i32 : i32, i32
  }
  func.func @transform_1(%arg0: i32) -> (i32, i32) {
    %c0_i32 = arith.constant 0 : i32
    %c0_i32_0 = arith.constant 0 : i32
    %c0_i32_1 = arith.constant 0 : i32
    return %c0_i32, %c0_i32_0 : i32, i32
  }
  func.func @transform_2(%arg0: i32) -> (i32, i32) {
    %c0_i32 = arith.constant 0 : i32
    %c0_i32_0 = arith.constant 0 : i32
    %c0_i32_1 = arith.constant 0 : i32
    return %c0_i32, %c0_i32_0 : i32, i32
  }
  func.func @transform_3(%arg0: i32) -> (i32, i32) {
    %c0_i32 = arith.constant 0 : i32
    %c0_i32_0 = arith.constant 0 : i32
    %c0_i32_1 = arith.constant 0 : i32
    return %c0_i32, %c0_i32_0 : i32, i32
  }
  func.func @transform_4(%arg0: i32) -> (i32, i32) {
    %c0_i32 = arith.constant 0 : i32
    %c0_i32_0 = arith.constant 0 : i32
    %c0_i32_1 = arith.constant 0 : i32
    return %c0_i32, %c0_i32_0 : i32, i32
  }
  func.func @transform_5(%arg0: i32) -> (i32, i32) {
    %c0_i32 = arith.constant 0 : i32
    %c0_i32_0 = arith.constant 0 : i32
    return %arg0, %c0_i32 : i32, i32
  }
}

</mosaic_0001>

<llo_original>
// kernel: tpu_custom_call.1
$region0: #{tpu_custom_call.1}
  #allocation0 [shape = 'u32[]', space=smem, size = 0x4, offset = 0x4, fixed_abs, tag = 'smem constant byte address 0x4 - core index']
  #allocation1 [shape = 'u32[144,128]{1,0:T(1,128)}', space=vmem, size = 0x12000, scoped, tag = 'internal scratch']
  %s0 = inlined_call_operand.vmem [shape: f32[8,4], index: 0, kind: input, shape index: {}]
  %s1 = inlined_call_operand.vmem [shape: f32[4,64], index: 1, kind: input, shape index: {}]
  %s2 = inlined_call_operand.vmem [shape: f32[1,64], index: 2, kind: input, shape index: {}]
  %s3 = inlined_call_operand.hbm [shape: f32[64,128], index: 3, kind: input, shape index: {}]
  %s4 = inlined_call_operand.vmem [shape: f32[1,128], index: 4, kind: input, shape index: {}]
  %s5 = inlined_call_operand.hbm [shape: f32[8,128], index: 5, kind: output, shape index: {}]
  %s6 = sld [smem:[#allocation0]]
  $region34: #{tpu_custom_call.1} parent=0
    _
  %s8 = ssub.s32 1, %s6
  %s9 = scalar_select 0, %s8, %s6
  $region1: #{tpu_custom_call.1} parent=0
    #allocation2 [shape = 'u8[32768]{0}', space=vmem, size = 0x8000, scoped, tag = 'input window, operand 3, single buffered']
    #allocation3 [shape = 's32[1]{0}', space=sflag, size = 0x4, scoped, tag = 'scoped memory for tpu_custom_call.1']
    #allocation4 [shape = 's32[1]{0}', space=sflag, size = 0x4, scoped, tag = 'scoped memory for tpu_custom_call.1']
    #allocation5 [shape = 'u8[4096]{0}', space=vmem, size = 0x1000, scoped, tag = 'output window, operand 0, single buffered']
    %10 = vsyncpa [#allocation3], 0
    %11 = vsyncpa [#allocation4], 0
    // Predicated region
    $region2: #{tpu_custom_call.1} parent=1 // pred_check
      _
    $region3: #{tpu_custom_call.1} parent=1 // pred_check_branch
      %13 = sbr.rel (0) target = $region5
    $region4: #{tpu_custom_call.1} parent=1 // pred_region
      _
    $region5: #{tpu_custom_call.1} parent=1 // pred_fallthru
      _
    // Predicated region
    $region6: #{tpu_custom_call.1} parent=1 // pred_check
      _
    $region7: #{tpu_custom_call.1} parent=1 // pred_check_branch
      %15 = sbr.rel (0) target = $region9
    $region8: #{tpu_custom_call.1} parent=1 // pred_region
      _
    $region9: #{tpu_custom_call.1} parent=1 // pred_fallthru
      _
    // Predicated region
    $region10: #{tpu_custom_call.1} parent=1 // pred_check
      _
    $region11: #{tpu_custom_call.1} parent=1 // pred_check_branch
      %17 = sbr.rel (0) target = $region13
    $region12: #{tpu_custom_call.1} parent=1 // pred_region
      _
    $region13: #{tpu_custom_call.1} parent=1 // pred_fallthru
      _
    // Predicated region
    $region14: #{tpu_custom_call.1} parent=1 // pred_check
      _
    $region15: #{tpu_custom_call.1} parent=1 // pred_check_branch
      %19 = sbr.rel (0) target = $region17
    $region16: #{tpu_custom_call.1} parent=1 // pred_region
      %s21 = ssub.s32 1024, 1024
      %22 = vsyncadd [#allocation3], %s21
      %s23 = sshll.u32 [#allocation2], 4
      %s24 = int_to_ptr.vmem [resolvable:$true] %s23
      %29 = dma.hbm_to_vmem [thread:$0]  %s3, 1024, %s24, [#allocation3], 128, 128, 8
    $region17: #{tpu_custom_call.1} parent=1 // pred_fallthru
      _
    // Predicated region
    $region18: #{tpu_custom_call.1} parent=1 // pred_check
      _
    $region19: #{tpu_custom_call.1} parent=1 // pred_check_branch
      %31 = sbr.rel (0) target = $region21
    $region20: #{tpu_custom_call.1} parent=1 // pred_region
      _
    $region21: #{tpu_custom_call.1} parent=1 // pred_fallthru
      _
    // Predicated region
    $region22: #{tpu_custom_call.1} parent=1 // pred_check
      _
    $region23: #{tpu_custom_call.1} parent=1 // pred_check_branch
      %33 = sbr.rel (0) target = $region25
    $region24: #{tpu_custom_call.1} parent=1 // pred_region
      %34 = dma.done [#allocation3], 1024
    $region25: #{tpu_custom_call.1} parent=1 // pred_fallthru
      _
    %v35 = vld [vmem:[%s0] sm:$0xff]
    %v36 = vld [vmem:[%s1] sm:$0xf]
    %v37 = vld [vmem:[%s2] sm:$0x1]
    %v39 = vlaneseq
    %v40 = vshrl.u32 %v39, 7
    %v41 = vsub.s32 0, %v40
    %v42 = vrot.slane %v37, %v41
    %vm44 = vcmask 31744
    %v46 = vsel %vm44, %v35, 0
    %vm48 = vcmask 1043456
    %v50 = vsel %vm48, %v36, 0
    %52 = vmatprep.subr.mxu0 0.0
    %53 = vmatpush1.msra.mxu0 0.0
    %54 = vmatprep.subr.mxu0 0.0
    %55 = vmatpush1.msra.mxu0 0.0
    %56 = vmatprep.subr.mxu0 0.0
    %57 = vmatpush1.msra.mxu0 0.0
    %58 = vmatprep.subr.mxu0 0.0
    %59 = vmatpush1.msra.mxu0 0.0
    %60 = vmatprep.subr.mxu0 0.0
    %61 = vmatpush1.msra.mxu0 0.0
    %62 = vmatprep.subr.mxu0 0.0
    %63 = vmatpush1.msra.mxu0 0.0
    %64 = vmatprep.subr.mxu0 0.0
    %65 = vmatpush1.msra.mxu0 0.0
    %66 = vmatprep.subr.mxu0 0.0
    %67 = vmatpush1.msra.mxu0 0.0
    %68 = vmatprep.subr.mxu0 0.0
    %69 = vmatpush1.msra.mxu0 0.0
    %70 = vmatprep.subr.mxu0 0.0
    %71 = vmatpush1.msra.mxu0 0.0
    %72 = vmatprep.subr.mxu0 0.0
    %73 = vmatpush1.msra.mxu0 0.0
    %74 = vmatprep.subr.mxu0 0.0
    %75 = vmatpush1.msra.mxu0 0.0
    %76 = vmatprep.subr.mxu0 0.0
    %77 = vmatpush1.msra.mxu0 0.0
    %78 = vmatprep.subr.mxu0 0.0
    %79 = vmatpush1.msra.mxu0 0.0
    %80 = vmatprep.subr.mxu0 0.0
    %81 = vmatpush1.msra.mxu0 0.0
    %82 = vmatprep.subr.mxu0 0.0
    %83 = vmatpush1.msra.mxu0 %v50
    %84 = vmatprep.subr.mxu0 0.0
    %85 = vmatpush2.msra.mxu0 0.0
    %86 = vmatprep.subr.mxu0 0.0
    %87 = vmatpush2.msra.mxu0 0.0
    %88 = vmatprep.subr.mxu0 0.0
    %89 = vmatpush2.msra.mxu0 0.0
    %90 = vmatprep.subr.mxu0 0.0
    %91 = vmatpush2.msra.mxu0 0.0
    %92 = vmatprep.subr.mxu0 0.0
    %93 = vmatpush2.msra.mxu0 0.0
    %94 = vmatprep.subr.mxu0 0.0
    %95 = vmatpush2.msra.mxu0 0.0
    %96 = vmatprep.subr.mxu0 0.0
    %97 = vmatpush2.msra.mxu0 0.0
    %98 = vmatprep.subr.mxu0 0.0
    %99 = vmatpush2.msra.mxu0 0.0
    %100 = vmatprep.subr.mxu0 0.0
    %101 = vmatpush2.msra.mxu0 0.0
    %102 = vmatprep.subr.mxu0 0.0
    %103 = vmatpush2.msra.mxu0 0.0
    %104 = vmatprep.subr.mxu0 0.0
    %105 = vmatpush2.msra.mxu0 0.0
    %106 = vmatprep.subr.mxu0 0.0
    %107 = vmatpush2.msra.mxu0 0.0
    %108 = vmatprep.subr.mxu0 0.0
    %109 = vmatpush2.msra.mxu0 0.0
    %110 = vmatprep.subr.mxu0 0.0
    %111 = vmatpush2.msra.mxu0 0.0
    %112 = vmatprep.subr.mxu0 0.0
    %113 = vmatpush2.msra.mxu0 0.0
    %114 = vmatprep.subr.mxu0 0.0
    %115 = vmatpush2.msra.mxu0 0.0
    %116 = vmatprep.mubr.f32.mxu0 0.0
    %117 = vmatmul.mubr.f32.gmra.mxu0 %v46
    %v118 = vpop.f32.mrf.mxu0
    %v119 = vadd.f32 %v42, %v118
    %v120 = vpop.f32.mrf.mxu0
    %121 = vdwg.mxu0
    %v122 = vmax.f32 %v119, 0.0
    %v123 = vld [vmem:[#allocation2] sm:$0xff]
    %v124 = vld [vmem:[#allocation2 + $0x8] sm:$0xff]
    %v125 = vld [vmem:[#allocation2 + $0x10] sm:$0xff]
    %v126 = vld [vmem:[#allocation2 + $0x18] sm:$0xff]
    %v127 = vld [vmem:[#allocation2 + $0x20] sm:$0xff]
    %v128 = vld [vmem:[#allocation2 + $0x28] sm:$0xff]
    %v129 = vld [vmem:[#allocation2 + $0x30] sm:$0xff]
    %v130 = vld [vmem:[#allocation2 + $0x38] sm:$0xff]
    %v131 = vld [vmem:[%s4] sm:$0x1]
    %v133 = vlaneseq
    %v134 = vshrl.u32 %v133, 7
    %v135 = vsub.s32 0, %v134
    %v136 = vrot.slane %v131, %v135
    %vm138 = vcmask 523264
    %v140 = vsel %vm138, %v122, 0
    %142 = vmatprep.subr.mxu0 0.0
    %143 = vmatpush1.msra.mxu0 0.0
    %144 = vmatprep.subr.mxu0 0.0
    %145 = vmatpush1.msra.mxu0 0.0
    %146 = vmatprep.subr.mxu0 0.0
    %147 = vmatpush1.msra.mxu0 0.0
    %148 = vmatprep.subr.mxu0 0.0
    %149 = vmatpush1.msra.mxu0 0.0
    %150 = vmatprep.subr.mxu0 0.0
    %151 = vmatpush1.msra.mxu0 0.0
    %152 = vmatprep.subr.mxu0 0.0
    %153 = vmatpush1.msra.mxu0 0.0
    %154 = vmatprep.subr.mxu0 0.0
    %155 = vmatpush1.msra.mxu0 0.0
    %156 = vmatprep.subr.mxu0 0.0
    %157 = vmatpush1.msra.mxu0 0.0
    %158 = vmatprep.subr.mxu0 0.0
    %159 = vmatpush1.msra.mxu0 %v130
    %160 = vmatprep.subr.mxu0 0.0
    %161 = vmatpush1.msra.mxu0 %v129
    %162 = vmatprep.subr.mxu0 0.0
    %163 = vmatpush1.msra.mxu0 %v128
    %164 = vmatprep.subr.mxu0 0.0
    %165 = vmatpush1.msra.mxu0 %v127
    %166 = vmatprep.subr.mxu0 0.0
    %167 = vmatpush1.msra.mxu0 %v126
    %168 = vmatprep.subr.mxu0 0.0
    %169 = vmatpush1.msra.mxu0 %v125
    %170 = vmatprep.subr.mxu0 0.0
    %171 = vmatpush1.msra.mxu0 %v124
    %172 = vmatprep.subr.mxu0 0.0
    %173 = vmatpush1.msra.mxu0 %v123
    %174 = vmatprep.subr.mxu0 0.0
    %175 = vmatpush2.msra.mxu0 0.0
    %176 = vmatprep.subr.mxu0 0.0
    %177 = vmatpush2.msra.mxu0 0.0
    %178 = vmatprep.subr.mxu0 0.0
    %179 = vmatpush2.msra.mxu0 0.0
    %180 = vmatprep.subr.mxu0 0.0
    %181 = vmatpush2.msra.mxu0 0.0
    %182 = vmatprep.subr.mxu0 0.0
    %183 = vmatpush2.msra.mxu0 0.0
    %184 = vmatprep.subr.mxu0 0.0
    %185 = vmatpush2.msra.mxu0 0.0
    %186 = vmatprep.subr.mxu0 0.0
    %187 = vmatpush2.msra.mxu0 0.0
    %188 = vmatprep.subr.mxu0 0.0
    %189 = vmatpush2.msra.mxu0 0.0
    %190 = vmatprep.subr.mxu0 0.0
    %191 = vmatpush2.msra.mxu0 0.0
    %192 = vmatprep.subr.mxu0 0.0
    %193 = vmatpush2.msra.mxu0 0.0
    %194 = vmatprep.subr.mxu0 0.0
    %195 = vmatpush2.msra.mxu0 0.0
    %196 = vmatprep.subr.mxu0 0.0
    %197 = vmatpush2.msra.mxu0 0.0
    %198 = vmatprep.subr.mxu0 0.0
    %199 = vmatpush2.msra.mxu0 0.0
    %200 = vmatprep.subr.mxu0 0.0
    %201 = vmatpush2.msra.mxu0 0.0
    %202 = vmatprep.subr.mxu0 0.0
    %203 = vmatpush2.msra.mxu0 0.0
    %204 = vmatprep.subr.mxu0 0.0
    %205 = vmatpush2.msra.mxu0 0.0
    %206 = vmatprep.mubr.f32.mxu0 0.0
    %207 = vmatmul.mubr.f32.gmra.mxu0 %v140
    %v208 = vpop.f32.mrf.mxu0
    %v209 = vadd.f32 %v136, %v208
    %v210 = vpop.f32.mrf.mxu0
    %211 = vdwg.mxu0
    %212 = vst [vmem:[#allocation5] sm:$0xff] %v209
    // Predicated region
    $region26: #{tpu_custom_call.1} parent=1 // pred_check
      _
    $region27: #{tpu_custom_call.1} parent=1 // pred_check_branch
      %214 = sbr.rel (0) target = $region29
    $region28: #{tpu_custom_call.1} parent=1 // pred_region
      %s216 = ssub.s32 128, 128
      %217 = vsyncadd [#allocation4], %s216
      %s219 = sshll.u32 [#allocation5], 4
      %s220 = int_to_ptr.vmem [resolvable:$true] %s219
      %222 = dma.vmem_to_hbm [thread:$0]  %s220, 128, %s5, [#allocation4]
    $region29: #{tpu_custom_call.1} parent=1 // pred_fallthru
      _
    // Predicated region
    $region30: #{tpu_custom_call.1} parent=1 // pred_check
      _
    $region31: #{tpu_custom_call.1} parent=1 // pred_check_branch
      %224 = sbr.rel (0) target = $region33
    $region32: #{tpu_custom_call.1} parent=1 // pred_region
      %225 = dma.done [#allocation4], 128
    $region33: #{tpu_custom_call.1} parent=1 // pred_fallthru
      _
    %226 = vsyncpa [#allocation3], 1
    %227 = vsyncpa [#allocation4], 1

</llo_original>
